<compile_context>
chip_gen: v5e
topology: v5e:2x2
jax: 0.10.0
libtpu: 0.0.40
codegen_flags: <defaults>
</compile_context>

<pallas_src>
import functools

import jax
import jax.numpy as jnp
from jax.experimental import pallas as pl
from jax.experimental.pallas import tpu as pltpu

LANES = 128
SUBLANES = 8
DEFAULT_BLOCK_ROWS = 4096   # 4096 * 128 * 4 B = 2 MiB per f32 input tile
DEFAULT_NUM_SPLITS = 2      # leading "parallel" axis (v7x has 2 TCs / chip)


def _dice_kernel(x_ref, t_ref, oxt_ref, osum_ref, *,
                 rows, block_rows, steps_per_split, mask_needed):
    """Accumulates per-split partial sums of x*t and x+t into (1,8,128) blocks."""
    i = pl.program_id(0)   # split index   ("parallel")
    j = pl.program_id(1)   # step in split ("arbitrary" reduction)

    @pl.when(j == 0)
    def _():
        oxt_ref[...] = jnp.zeros_like(oxt_ref)
        osum_ref[...] = jnp.zeros_like(osum_ref)

    # Cast narrow dtypes (bf16 / int8 masks / ...) to f32 in-kernel; no
    # wrapper-side astype pass over HBM.
    x = x_ref[...].astype(jnp.float32)
    t = t_ref[...].astype(jnp.float32)

    if mask_needed:
        # The last in-range block may be partial (garbage past the array end)
        # and fully out-of-range blocks are clamped by the index_map, so zero
        # every row whose global index is >= rows.
        gblock = i * steps_per_split + j
        row_ids = gblock * block_rows + jax.lax.broadcasted_iota(
            jnp.int32, x.shape, 0)
        valid = row_ids < rows
        x = jnp.where(valid, x, 0.0)
        t = jnp.where(valid, t, 0.0)

    # Reduce the whole tile to a fixed (8, 128) partial (VPU adds across
    # vregs; no cross-lane work in the hot loop).
    g = block_rows // SUBLANES
    part_xt = jnp.sum((x * t).reshape(g, SUBLANES, LANES), axis=0)
    part_s = jnp.sum((x + t).reshape(g, SUBLANES, LANES), axis=0)
    oxt_ref[...] += part_xt.reshape(1, SUBLANES, LANES)
    osum_ref[...] += part_s.reshape(1, SUBLANES, LANES)


def dice_loss(inputs, targets, smooth=1.0,
              block_rows=DEFAULT_BLOCK_ROWS, num_splits=DEFAULT_NUM_SPLITS):
    """JAX/Pallas equivalent of DiceLoss.forward(inputs, targets, smooth)."""
    # Flatten in NCHW (row-major) order, same as PyTorch .reshape(-1).
    # Contiguous reshapes are bitcasts; keep the native dtype (cast in-kernel).
    x = inputs.reshape(-1)
    t = targets.reshape(-1)
    n = x.shape[0]

    tile_min = SUBLANES * LANES
    n_pad = pl.cdiv(n, tile_min) * tile_min
    if n_pad != n:
        # Rare fallback: flattened length not a multiple of 1024.  Minimal
        # zero-pad so the lane-major 2D view exists (zeros are exact for all
        # three Dice sums).
        x = jnp.pad(x, (0, n_pad - n))
        t = jnp.pad(t, (0, n_pad - n))

    rows = n_pad // LANES                       # multiple of 8
    x2 = x.reshape(rows, LANES)
    t2 = t.reshape(rows, LANES)

    block_rows = min(int(block_rows), rows)
    block_rows = max(SUBLANES, (block_rows // SUBLANES) * SUBLANES)
    steps = pl.cdiv(rows, block_rows)
    splits = max(1, min(int(num_splits), steps))
    steps_per_split = pl.cdiv(steps, splits)
    mask_needed = (splits * steps_per_split * block_rows) != rows

    def in_index(i, j):
        # Clamp over-range blocks (they are fully masked inside the kernel).
        return (jnp.minimum(i * steps_per_split + j, steps - 1), 0)

    kernel = functools.partial(
        _dice_kernel, rows=rows, block_rows=block_rows,
        steps_per_split=steps_per_split, mask_needed=mask_needed)

    part_xt, part_sum = pl.pallas_call(
        kernel,
        out_shape=(
            jax.ShapeDtypeStruct((splits, SUBLANES, LANES), jnp.float32),
            jax.ShapeDtypeStruct((splits, SUBLANES, LANES), jnp.float32),
        ),
        grid_spec=pltpu.PrefetchScalarGridSpec(
            num_scalar_prefetch=0,
            grid=(splits, steps_per_split),
            in_specs=[
                pl.BlockSpec((block_rows, LANES), in_index),
                pl.BlockSpec((block_rows, LANES), in_index),
            ],
            out_specs=[
                pl.BlockSpec((1, SUBLANES, LANES), lambda i, j: (i, 0, 0)),
                pl.BlockSpec((1, SUBLANES, LANES), lambda i, j: (i, 0, 0)),
            ],
        ),
        compiler_params=pltpu.CompilerParams(
            dimension_semantics=("parallel", "arbitrary")),
    )(x2, t2)

    # Tiny finalize on the (splits, 8, 128) partials in plain JAX.
    intersection = jnp.sum(part_xt)
    denom = jnp.sum(part_sum)
    dice = (2.0 * intersection + smooth) / (denom + smooth)
    return (1.0 - dice).astype(jnp.float32)


def dice_loss_ref(inputs, targets, smooth=1.0):
    x = inputs.reshape(-1).astype(jnp.float32)
    t = targets.reshape(-1).astype(jnp.float32)
    intersection = jnp.sum(x * t)
    dice = (2.0 * intersection + smooth) / (jnp.sum(x) + jnp.sum(t) + smooth)
    return 1.0 - dice


if __name__ == "__main__":
    key = jax.random.PRNGKey(0)
    k1, k2, k3, k4 = jax.random.split(key, 4)

    # Test 1: small 2D-AE segmentation shapes, NCHW = (2, 4, 16, 16), f32.
    logits = jax.random.normal(k1, (2, 4, 16, 16), dtype=jnp.float32)
    inputs = jax.nn.sigmoid(logits)                                    # probs
    targets = (jax.random.uniform(k2, (2, 4, 16, 16)) > 0.5).astype(jnp.float32)

    loss = jax.block_until_ready(dice_loss(inputs, targets, smooth=1.0))
    ref = jax.block_until_ready(dice_loss_ref(inputs, targets, smooth=1.0))
    assert jnp.allclose(loss, ref, rtol=1e-5, atol=1e-6), (loss, ref)

    # Test 2: ragged length + narrow dtype + multi-step / multi-split path
    # (small block_rows forces the tail-mask and index-clamp code paths).
    logits2 = jax.random.normal(k3, (2, 3, 33, 33), dtype=jnp.float32)
    inputs2 = jax.nn.sigmoid(logits2).astype(jnp.bfloat16)
    targets2 = (jax.random.uniform(k4, (2, 3, 33, 33)) > 0.5).astype(jnp.float32)

    loss2 = jax.block_until_ready(
        dice_loss(inputs2, targets2, smooth=1.0, block_rows=16, num_splits=2))
    ref2 = jax.block_until_ready(dice_loss_ref(inputs2, targets2, smooth=1.0))
    assert jnp.allclose(loss2, ref2, rtol=1e-5, atol=1e-6), (loss2, ref2)

    print("KERNEL_OK")
</pallas_src>

<mosaic_0001>
module attributes {stable_mosaic.version = 11 : i64} {
  func.func @_dice_kernel(%arg0: i32, %arg1: i32, %arg2: memref<16x128xf32, #tpu.memory_space<vmem>>, %arg3: memref<16x128xf32, #tpu.memory_space<vmem>>, %arg4: memref<1x8x128xf32, #tpu.memory_space<vmem>>, %arg5: memref<1x8x128xf32, #tpu.memory_space<vmem>>) attributes {dimension_semantics = [#tpu.dimension_semantics<parallel>, #tpu.dimension_semantics<arbitrary>], iteration_bounds = array<i64: 1, 1>, scalar_prefetch = 0 : i64, scratch_operands = 0 : i64, tpu.core_type = #tpu.core_type<tc>, window_params = [{transform_indices = @transform_0, window_bounds = array<i64: 16, 128>}, {transform_indices = @transform_1, window_bounds = array<i64: 16, 128>}, {transform_indices = @transform_2, window_bounds = array<i64: 1, 8, 128>}, {transform_indices = @transform_3, window_bounds = array<i64: 1, 8, 128>}]} {
    %c0_i32 = arith.constant 0 : i32
    %0 = arith.cmpi eq, %arg1, %c0_i32 : i32
    %1 = arith.extui %0 : i1 to i32
    %c0_i32_0 = arith.constant 0 : i32
    %2 = arith.cmpi ne, %1, %c0_i32_0 : i32
    scf.if %2 {
      %cst_17 = arith.constant 0.000000e+00 : f32
      %19 = vector.broadcast %cst_17 : f32 to vector<1x8x128xf32>
      %c0_18 = arith.constant 0 : index
      %c0_19 = arith.constant 0 : index
      %c0_20 = arith.constant 0 : index
      %20 = vector.load %arg4[%c0_18, %c0_19, %c0_20] : memref<1x8x128xf32, #tpu.memory_space<vmem>>, vector<1x8x128xf32>
      tpu.vector_store %arg4[%c0_18, %c0_19, %c0_20], %19 {strides = array<i32>} : memref<1x8x128xf32, #tpu.memory_space<vmem>>, vector<1x8x128xf32>,
      %cst_21 = arith.constant 0.000000e+00 : f32
      %21 = vector.broadcast %cst_21 : f32 to vector<1x8x128xf32>
      %c0_22 = arith.constant 0 : index
      %c0_23 = arith.constant 0 : index
      %c0_24 = arith.constant 0 : index
      %22 = vector.load %arg5[%c0_22, %c0_23, %c0_24] : memref<1x8x128xf32, #tpu.memory_space<vmem>>, vector<1x8x128xf32>
      tpu.vector_store %arg5[%c0_22, %c0_23, %c0_24], %21 {strides = array<i32>} : memref<1x8x128xf32, #tpu.memory_space<vmem>>, vector<1x8x128xf32>,
    } else {
    }
    %c0 = arith.constant 0 : index
    %c0_1 = arith.constant 0 : index
    %3 = vector.load %arg2[%c0, %c0_1] : memref<16x128xf32, #tpu.memory_space<vmem>>, vector<16x128xf32>
    %c0_2 = arith.constant 0 : index
    %c0_3 = arith.constant 0 : index
    %4 = vector.load %arg3[%c0_2, %c0_3] : memref<16x128xf32, #tpu.memory_space<vmem>>, vector<16x128xf32>
    %5 = arith.mulf %3, %4 : vector<16x128xf32>
    %6 = vector.shape_cast %5 : vector<16x128xf32> to vector<2x8x128xf32>
    %cst = arith.constant dense<0.000000e+00> : vector<8x128xf32>
    %7 = vector.multi_reduction <add>, %6, %cst [0] : vector<2x8x128xf32> to vector<8x128xf32>
    %8 = arith.addf %3, %4 : vector<16x128xf32>
    %9 = vector.shape_cast %8 : vector<16x128xf32> to vector<2x8x128xf32>
    %cst_4 = arith.constant dense<0.000000e+00> : vector<8x128xf32>
    %10 = vector.multi_reduction <add>, %9, %cst_4 [0] : vector<2x8x128xf32> to vector<8x128xf32>
    %c0_5 = arith.constant 0 : index
    %c0_6 = arith.constant 0 : index
    %c0_7 = arith.constant 0 : index
    %11 = vector.load %arg4[%c0_5, %c0_6, %c0_7] : memref<1x8x128xf32, #tpu.memory_space<vmem>>, vector<1x8x128xf32>
    %12 = vector.shape_cast %7 : vector<8x128xf32> to vector<1x8x128xf32>
    %13 = arith.addf %11, %12 : vector<1x8x128xf32>
    %c0_8 = arith.constant 0 : index
    %c0_9 = arith.constant 0 : index
    %c0_10 = arith.constant 0 : index
    %14 = vector.load %arg4[%c0_8, %c0_9, %c0_10] : memref<1x8x128xf32, #tpu.memory_space<vmem>>, vector<1x8x128xf32>
    tpu.vector_store %arg4[%c0_8, %c0_9, %c0_10], %13 {strides = array<i32>} : memref<1x8x128xf32, #tpu.memory_space<vmem>>, vector<1x8x128xf32>,
    %c0_11 = arith.constant 0 : index
    %c0_12 = arith.constant 0 : index
    %c0_13 = arith.constant 0 : index
    %15 = vector.load %arg5[%c0_11, %c0_12, %c0_13] : memref<1x8x128xf32, #tpu.memory_space<vmem>>, vector<1x8x128xf32>
    %16 = vector.shape_cast %10 : vector<8x128xf32> to vector<1x8x128xf32>
    %17 = arith.addf %15, %16 : vector<1x8x128xf32>
    %c0_14 = arith.constant 0 : index
    %c0_15 = arith.constant 0 : index
    %c0_16 = arith.constant 0 : index
    %18 = vector.load %arg5[%c0_14, %c0_15, %c0_16] : memref<1x8x128xf32, #tpu.memory_space<vmem>>, vector<1x8x128xf32>
    tpu.vector_store %arg5[%c0_14, %c0_15, %c0_16], %17 {strides = array<i32>} : memref<1x8x128xf32, #tpu.memory_space<vmem>>, vector<1x8x128xf32>,
    return
  }
  func.func @transform_0(%arg0: i32, %arg1: i32) -> (i32, i32) {
    %c1_i32 = arith.constant 1 : i32
    %0 = arith.muli %arg0, %c1_i32 : i32
    %1 = arith.addi %0, %arg1 : i32
    %c0_i32 = arith.constant 0 : i32
    %2 = arith.minsi %1, %c0_i32 : i32
    %c0_i32_0 = arith.constant 0 : i32
    %c0_i32_1 = arith.constant 0 : i32
    return %2, %c0_i32_0 : i32, i32
  }
  func.func @transform_1(%arg0: i32, %arg1: i32) -> (i32, i32) {
    %c1_i32 = arith.constant 1 : i32
    %0 = arith.muli %arg0, %c1_i32 : i32
    %1 = arith.addi %0, %arg1 : i32
    %c0_i32 = arith.constant 0 : i32
    %2 = arith.minsi %1, %c0_i32 : i32
    %c0_i32_0 = arith.constant 0 : i32
    %c0_i32_1 = arith.constant 0 : i32
    return %2, %c0_i32_0 : i32, i32
  }
  func.func @transform_2(%arg0: i32, %arg1: i32) -> (i32, i32, i32) {
    %c0_i32 = arith.constant 0 : i32
    %c0_i32_0 = arith.constant 0 : i32
    %c0_i32_1 = arith.constant 0 : i32
    return %arg0, %c0_i32, %c0_i32_0 : i32, i32, i32
  }
  func.func @transform_3(%arg0: i32, %arg1: i32) -> (i32, i32, i32) {
    %c0_i32 = arith.constant 0 : i32
    %c0_i32_0 = arith.constant 0 : i32
    %c0_i32_1 = arith.constant 0 : i32
    return %arg0, %c0_i32, %c0_i32_0 : i32, i32, i32
  }
}

</mosaic_0001>

<llo_original>
// kernel: tpu_custom_call.1
$region0: #{tpu_custom_call.1}
  #allocation0 [shape = 'u32[]', space=smem, size = 0x4, offset = 0x4, fixed_abs, tag = 'smem constant byte address 0x4 - core index']
  #allocation1 [shape = 'u32[72,128]{1,0:T(1,128)}', space=vmem, size = 0x9000, scoped, tag = 'internal scratch']
  %s0 = inlined_call_operand.hbm [shape: f32[16,128], index: 0, kind: input, shape index: {}]
  %s1 = inlined_call_operand.hbm [shape: f32[16,128], index: 1, kind: input, shape index: {}]
  %s2 = inlined_call_operand.hbm [shape: f32[1,8,128], index: 2, kind: output, shape index: {0}]
  %s3 = inlined_call_operand.hbm [shape: f32[1,8,128], index: 3, kind: output, shape index: {1}]
  %4 = xla_tuple %s2, %s3
  %s5 = sld [smem:[#allocation0]]
  $region38: #{tpu_custom_call.1} parent=0
    _
  %s7 = ssub.s32 1, %s5
  %s8 = scalar_select 0, %s7, %s5
  $region1: #{tpu_custom_call.1} parent=0
    #allocation2 [shape = 'u8[8192]{0}', space=vmem, size = 0x2000, scoped, tag = 'input window, operand 0, single buffered']
    #allocation3 [shape = 's32[1]{0}', space=sflag, size = 0x4, scoped, tag = 'scoped memory for tpu_custom_call.1']
    #allocation4 [shape = 's32[1]{0}', space=sflag, size = 0x4, scoped, tag = 'scoped memory for tpu_custom_call.1']
    #allocation5 [shape = 'u8[8192]{0}', space=vmem, size = 0x2000, scoped, tag = 'input window, operand 1, single buffered']
    #allocation6 [shape = 's32[1]{0}', space=sflag, size = 0x4, scoped, tag = 'scoped memory for tpu_custom_call.1']
    #allocation7 [shape = 'u8[4096]{0}', space=vmem, size = 0x1000, scoped, tag = 'output window, operand 0, single buffered']
    #allocation8 [shape = 'u8[4096]{0}', space=vmem, size = 0x1000, scoped, tag = 'output window, operand 1, single buffered']
    #allocation9 [shape = 's32[1]{0}', space=sflag, size = 0x4, scoped, tag = 'scoped memory for tpu_custom_call.1']
    %9 = vsyncpa [#allocation3], 0
    %10 = vsyncpa [#allocation6], 0
    %11 = vsyncpa [#allocation4], 0
    %12 = vsyncpa [#allocation9], 0
    // Predicated region
    $region2: #{tpu_custom_call.1} parent=1 // pred_check
      _
    $region3: #{tpu_custom_call.1} parent=1 // pred_check_branch
      %14 = sbr.rel (0) target = $region5
    $region4: #{tpu_custom_call.1} parent=1 // pred_region
      %s15 = sadd.s32 0, 0
      %p16 = scmp.lt.s32.totalorder %s15, 0
      %s17 = scalar_select %p16, %s15, 0
      %s18 = smul.u32 2, %s17
      %20 = vsyncadd [#allocation3], 0
      %s21 = smul.addr %s18, 8
      %s22 = scalar_lea.hbm %s0, %s21
      %s23 = sshll.u32 %s22, 4
      %s24 = int_to_ptr.hbm [resolvable:$true] %s23
      %s25 = sshll.u32 [#allocation2], 4
      %s26 = int_to_ptr.vmem [resolvable:$true] %s25
      %31 = dma.hbm_to_vmem [thread:$0]  %s24, 256, %s26, [#allocation3], 128, 128, 8
    $region5: #{tpu_custom_call.1} parent=1 // pred_fallthru
      _
    // Predicated region
    $region6: #{tpu_custom_call.1} parent=1 // pred_check
      _
    $region7: #{tpu_custom_call.1} parent=1 // pred_check_branch
      %33 = sbr.rel (0) target = $region9
    $region8: #{tpu_custom_call.1} parent=1 // pred_region
      %s34 = sadd.s32 0, 0
      %p35 = scmp.lt.s32.totalorder %s34, 0
      %s36 = scalar_select %p35, %s34, 0
      %s37 = smul.u32 2, %s36
      %39 = vsyncadd [#allocation6], 0
      %s40 = smul.addr %s37, 8
      %s41 = scalar_lea.hbm %s1, %s40
      %s42 = sshll.u32 %s41, 4
      %s43 = int_to_ptr.hbm [resolvable:$true] %s42
      %s44 = sshll.u32 [#allocation5], 4
      %s45 = int_to_ptr.vmem [resolvable:$true] %s44
      %50 = dma.hbm_to_vmem [thread:$0]  %s43, 256, %s45, [#allocation6], 128, 128, 8
    $region9: #{tpu_custom_call.1} parent=1 // pred_fallthru
      _
    // Predicated region
    $region10: #{tpu_custom_call.1} parent=1 // pred_check
      _
    $region11: #{tpu_custom_call.1} parent=1 // pred_check_branch
      %52 = sbr.rel (0) target = $region13
    $region12: #{tpu_custom_call.1} parent=1 // pred_region
      %54 = dma.done [#allocation3], 256
    $region13: #{tpu_custom_call.1} parent=1 // pred_fallthru
      _
    // Predicated region
    $region14: #{tpu_custom_call.1} parent=1 // pred_check
      _
    $region15: #{tpu_custom_call.1} parent=1 // pred_check_branch
      %56 = sbr.rel (0) target = $region17
    $region16: #{tpu_custom_call.1} parent=1 // pred_region
      %58 = dma.done [#allocation6], 256
    $region17: #{tpu_custom_call.1} parent=1 // pred_fallthru
      _
    %s59 = sadd.s32 0, 0
    %p60 = scmp.lt.s32.totalorder %s59, 0
    %s61 = scalar_select %p60, %s59, 0
    %s62 = smul.u32 2, %s61
    %s63 = sadd.s32 0, 0
    %p64 = scmp.lt.s32.totalorder %s63, 0
    %s65 = scalar_select %p64, %s63, 0
    %s66 = smul.u32 2, %s65
    %p67 = scmp.eq.s32.totalorder 0, 0
    // Predicated region
    $region18: #{tpu_custom_call.1} parent=1 // pred_check
      %p68 = pneg %p67
    $region19: #{tpu_custom_call.1} parent=1 // pred_check_branch
      %70 = sbr.rel (%p68) target = $region21
    $region20: #{tpu_custom_call.1} parent=1 // pred_region
      %71 = vst [vmem:[#allocation7] sm:$0xff] 0.0
      %72 = vst [vmem:[#allocation8] sm:$0xff] 0.0
    $region21: #{tpu_custom_call.1} parent=1 // pred_fallthru
      _
    %v73 = vld [vmem:[#allocation2] sm:$0xff]
    %v74 = vld [vmem:[#allocation2 + $0x8] sm:$0xff]
    %v75 = vld [vmem:[#allocation5] sm:$0xff]
    %v76 = vld [vmem:[#allocation5 + $0x8] sm:$0xff]
    %v77 = vmul.f32 %v73, %v75
    %v78 = vmul.f32 %v74, %v76
    %v79 = vadd.f32 %v77, %v78
    %v80 = vadd.f32 %v73, %v75
    %v81 = vadd.f32 %v74, %v76
    %v82 = vadd.f32 %v80, %v81
    %v83 = vld [vmem:[#allocation7] sm:$0xff]
    %v84 = vadd.f32 %v83, %v79
    %85 = vst [vmem:[#allocation7] sm:$0xff] %v84
    %v86 = vld [vmem:[#allocation8] sm:$0xff]
    %v87 = vadd.f32 %v86, %v82
    %88 = vst [vmem:[#allocation8] sm:$0xff] %v87
    // Predicated region
    $region22: #{tpu_custom_call.1} parent=1 // pred_check
      _
    $region23: #{tpu_custom_call.1} parent=1 // pred_check_branch
      %90 = sbr.rel (0) target = $region25
    $region24: #{tpu_custom_call.1} parent=1 // pred_region
      %92 = vsyncadd [#allocation4], 0
      %s94 = sshll.u32 [#allocation7], 4
      %s95 = int_to_ptr.vmem [resolvable:$true] %s94
      %s96 = sshll.u32 %s2, 4
      %s97 = int_to_ptr.hbm [resolvable:$true] %s96
      %99 = dma.vmem_to_hbm [thread:$0]  %s95, 128, %s97, [#allocation4]
    $region25: #{tpu_custom_call.1} parent=1 // pred_fallthru
      _
    // Predicated region
    $region26: #{tpu_custom_call.1} parent=1 // pred_check
      _
    $region27: #{tpu_custom_call.1} parent=1 // pred_check_branch
      %101 = sbr.rel (0) target = $region29
    $region28: #{tpu_custom_call.1} parent=1 // pred_region
      %103 = vsyncadd [#allocation9], 0
      %s105 = sshll.u32 [#allocation8], 4
      %s106 = int_to_ptr.vmem [resolvable:$true] %s105
      %s107 = sshll.u32 %s3, 4
      %s108 = int_to_ptr.hbm [resolvable:$true] %s107
      %110 = dma.vmem_to_hbm [thread:$0]  %s106, 128, %s108, [#allocation9]
    $region29: #{tpu_custom_call.1} parent=1 // pred_fallthru
      _
    // Predicated region
    $region30: #{tpu_custom_call.1} parent=1 // pred_check
      _
    $region31: #{tpu_custom_call.1} parent=1 // pred_check_branch
      %112 = sbr.rel (0) target = $region33
    $region32: #{tpu_custom_call.1} parent=1 // pred_region
      %114 = dma.done [#allocation4], 128
    $region33: #{tpu_custom_call.1} parent=1 // pred_fallthru
      _
    // Predicated region
    $region34: #{tpu_custom_call.1} parent=1 // pred_check
      _
    $region35: #{tpu_custom_call.1} parent=1 // pred_check_branch
      %116 = sbr.rel (0) target = $region37
    $region36: #{tpu_custom_call.1} parent=1 // pred_region
      %118 = dma.done [#allocation9], 128
    $region37: #{tpu_custom_call.1} parent=1 // pred_fallthru
      _
    %119 = vsyncpa [#allocation3], 1
    %120 = vsyncpa [#allocation6], 1
    %121 = vsyncpa [#allocation4], 1
    %122 = vsyncpa [#allocation9], 1

</llo_original>
